<compile_context>
chip_gen: v5e
topology: v5e:2x2
jax: 0.10.0
libtpu: 0.0.40
codegen_flags: <defaults>
</compile_context>

<pallas_src>
import math

import jax
import jax.numpy as jnp
from jax import lax
from jax.experimental import pallas as pl
from jax.experimental.pallas import tpu as pltpu


def _matmul_t(act, w):
    """act @ w.T for a PyTorch-layout weight w[out, in] (no transpose copies)."""
    return lax.dot_general(
        act, w,
        dimension_numbers=(((act.ndim - 1,), (1,)), ((), ())),
        preferred_element_type=jnp.float32)


def _full_spec(shape):
    nd = len(shape)
    return pl.BlockSpec(shape, lambda i, nd=nd: (0,) * nd)


# ---------------------------------------------------------------------------
# Kernel 1: Bahdanau attention + one LSTM step
# ---------------------------------------------------------------------------
def attn_lstm_kernel(
    x_ref,        # [B, Din]
    h_ref,        # [B, H]
    c_ref,        # [B, H]
    enc_ref,      # [B, S, 2H]
    wa_h_ref,     # [H, H]    attention weight, hidden slice   (PyTorch [out,in])
    wa_e_ref,     # [H, 2H]   attention weight, encoder slice
    ba_ref,       # [1, H]
    v_ref,        # [1, H]
    wih_x_ref,    # [4H, Din] LSTM W_ih, embedded-input slice
    wih_w_ref,    # [4H, 2H]  LSTM W_ih, weighted-context slice
    whh_ref,      # [4H, H]
    b_ref,        # [1, 4H]   b_ih + b_hh (pre-fused)
    attn_ref,     # [B, 1, S]
    hout_ref,     # [B, H]
    cout_ref,     # [B, H]
):
    B, S, E = enc_ref.shape          # E = 2H
    H = h_ref.shape[1]

    h = h_ref[...].astype(jnp.float32)                       # [B, H]
    enc = enc_ref[...].astype(jnp.float32)                   # [B, S, E]

    # ---- attention: energy = tanh(h @ Wa_h^T + enc @ Wa_e^T + ba)  (no concat)
    h_part = _matmul_t(h, wa_h_ref[...].astype(jnp.float32))          # [B, H]
    e_part = _matmul_t(enc.reshape(B * S, E),
                       wa_e_ref[...].astype(jnp.float32)).reshape(B, S, H)
    energy = jnp.tanh(e_part + h_part[:, None, :]
                      + ba_ref[...].astype(jnp.float32)[None])        # [B, S, H]

    # score = <energy, v> via a lane-axis reduce (avoids an N=1 MXU matmul)
    v_row = v_ref[...].astype(jnp.float32)                            # [1, H]
    scores = jnp.sum(energy * v_row[None], axis=-1)                   # [B, S]

    # softmax over source positions
    scores = scores - jnp.max(scores, axis=-1, keepdims=True)
    exp_s = jnp.exp(scores)
    attn = exp_s / jnp.sum(exp_s, axis=-1, keepdims=True)             # [B, S]
    attn_ref[...] = attn[:, None, :]

    # weighted context = sum_s attn[b,s] * enc[b,s,:]
    weighted = jnp.sum(attn[:, :, None] * enc, axis=1)                # [B, E]

    # ---- LSTM single step, PyTorch gate order (i, f, g, o); no input concat
    x = x_ref[...].astype(jnp.float32)                                # [B, Din]
    gates = (_matmul_t(x, wih_x_ref[...].astype(jnp.float32))
             + _matmul_t(weighted, wih_w_ref[...].astype(jnp.float32))
             + _matmul_t(h, whh_ref[...].astype(jnp.float32))
             + b_ref[...].astype(jnp.float32))                        # [B, 4H]

    # NOTE: for production dec_hid_dim (multiple of 128) these slices are
    # lane-aligned; at the toy H=32 they are sub-vreg extracts but negligible.
    i_g = jax.nn.sigmoid(gates[:, 0 * H:1 * H])
    f_g = jax.nn.sigmoid(gates[:, 1 * H:2 * H])
    g_g = jnp.tanh(gates[:, 2 * H:3 * H])
    o_g = jax.nn.sigmoid(gates[:, 3 * H:4 * H])

    c_new = f_g * c_ref[...].astype(jnp.float32) + i_g * g_g
    h_new = o_g * jnp.tanh(c_new)

    hout_ref[...] = h_new
    cout_ref[...] = c_new


# ---------------------------------------------------------------------------
# Kernel 2: output projection, vocab-tiled (streamed weight, parallel on V)
# ---------------------------------------------------------------------------
def fc_out_kernel(h_ref, wfc_ref, bfc_ref, pred_ref):
    # h_ref [B, H] (resident), wfc_ref [TILE_V, H], bfc_ref [1, TILE_V]
    h = h_ref[...].astype(jnp.float32)
    w = wfc_ref[...].astype(jnp.float32)
    pred_ref[...] = _matmul_t(h, w) + bfc_ref[...].astype(jnp.float32)


# ---------------------------------------------------------------------------
# Wrapper
# ---------------------------------------------------------------------------
def _round_up(x, m):
    return ((x + m - 1) // m) * m


def prepare_params(params, input_dim, weight_dtype=jnp.float32, tile_v=512):
    """One-time weight prep. Call once outside the decode loop (no per-step
    transposes / pads). Set weight_dtype=jnp.bfloat16 to halve weight
    streaming traffic at production sizes (slightly looser tolerance)."""
    H = params["w_hh"].shape[1]
    V = params["fc_w"].shape[0]
    wd = weight_dtype

    v_pad = _round_up(V, 128)
    tile_v = min(tile_v, v_pad)
    v_pad = _round_up(v_pad, tile_v)

    fc_w = jnp.pad(params["fc_w"], ((0, v_pad - V), (0, 0))).astype(wd)  # [Vp,H]
    fc_b = jnp.pad(params["fc_b"], (0, v_pad - V))[None, :].astype(wd)   # [1,Vp]

    return {
        "H": H, "V": V, "V_pad": v_pad, "TILE_V": tile_v, "Din": input_dim,
        # attention: split hidden / encoder slices of the [H, 3H] weight
        "wa_h": params["attn_w"][:, :H].astype(wd),          # [H, H]
        "wa_e": params["attn_w"][:, H:].astype(wd),          # [H, 2H]
        "ba":   params["attn_b"][None, :].astype(wd),        # [1, H]
        "v":    params["v_w"].astype(wd),                    # [1, H]
        # LSTM: split embedded / weighted-context slices of W_ih, fuse biases
        "wih_x": params["w_ih"][:, :input_dim].astype(wd),   # [4H, Din]
        "wih_w": params["w_ih"][:, input_dim:].astype(wd),   # [4H, 2H]
        "whh":   params["w_hh"].astype(wd),                  # [4H, H]
        "b_lstm": (params["b_ih"] + params["b_hh"])[None, :].astype(wd),  # [1,4H]
        # output projection, vocab padded to a multiple of TILE_V (128-aligned)
        "fc_w": fc_w,
        "fc_b": fc_b,
    }


def decoder_lstm_forward(input_seq, hidden, cell, encoder_outputs, prepped):
    B, Din = input_seq.shape
    _, H = hidden.shape
    _, S, E = encoder_outputs.shape
    V, V_pad, TILE_V = prepped["V"], prepped["V_pad"], prepped["TILE_V"]

    # ---- call 1: attention + LSTM step (tiny; whole problem resident) ------
    args1 = (input_seq, hidden, cell, encoder_outputs,
             prepped["wa_h"], prepped["wa_e"], prepped["ba"], prepped["v"],
             prepped["wih_x"], prepped["wih_w"], prepped["whh"],
             prepped["b_lstm"])
    out_shapes1 = (
        jax.ShapeDtypeStruct((B, 1, S), jnp.float32),   # attn
        jax.ShapeDtypeStruct((B, H), jnp.float32),      # hidden'
        jax.ShapeDtypeStruct((B, H), jnp.float32),      # cell'
    )
    flops1 = 2 * B * (S * E * H + H * H + S * H + (Din + E + H) * 4 * H)
    bytes1 = (sum(int(a.size) * a.dtype.itemsize for a in args1)
              + sum(math.prod(s.shape) * 4 for s in out_shapes1))

    attn, h_new, c_new = pl.pallas_call(
        attn_lstm_kernel,
        out_shape=out_shapes1,
        grid=(1,),
        in_specs=[_full_spec(a.shape) for a in args1],
        out_specs=tuple(_full_spec(s.shape) for s in out_shapes1),
        compiler_params=pltpu.CompilerParams(
            dimension_semantics=("arbitrary",),
            vmem_limit_bytes=32 * 1024 * 1024),
        cost_estimate=pl.CostEstimate(
            flops=flops1,
            transcendentals=B * S * (H + 1) + 5 * B * H,
            bytes_accessed=bytes1),
    )(*args1)

    # ---- call 2: fc_out, weight streamed over vocab tiles (parallel axis) --
    num_tiles = V_pad // TILE_V
    flops2 = 2 * B * H * V_pad
    bytes2 = (int(prepped["fc_w"].size) * prepped["fc_w"].dtype.itemsize
              + int(prepped["fc_b"].size) * prepped["fc_b"].dtype.itemsize
              + B * H * 4 + B * V_pad * 4)

    pred_pad = pl.pallas_call(
        fc_out_kernel,
        out_shape=jax.ShapeDtypeStruct((B, V_pad), jnp.float32),
        grid=(num_tiles,),
        in_specs=[
            pl.BlockSpec((B, H), lambda j: (0, 0)),       # h_new (resident)
            pl.BlockSpec((TILE_V, H), lambda j: (j, 0)),  # streamed weight tile
            pl.BlockSpec((1, TILE_V), lambda j: (0, j)),  # bias tile
        ],
        out_specs=pl.BlockSpec((B, TILE_V), lambda j: (0, j)),
        compiler_params=pltpu.CompilerParams(
            dimension_semantics=("parallel",),            # megacore split on v7x
            vmem_limit_bytes=32 * 1024 * 1024),
        cost_estimate=pl.CostEstimate(
            flops=flops2, transcendentals=0, bytes_accessed=bytes2),
    )(h_new, prepped["fc_w"], prepped["fc_b"])

    prediction = pred_pad[:, :V]
    # TODO(synk): for large B/S, add a batch grid axis so encoder_outputs is
    # streamed rather than fully resident.
    return prediction, attn, h_new, c_new


# ---------------------------------------------------------------------------
# Reference + test
# ---------------------------------------------------------------------------
def decoder_lstm_reference(input_seq, hidden, cell, encoder_outputs, params):
    B, S, E = encoder_outputs.shape
    H = hidden.shape[1]
    h_rep = jnp.broadcast_to(hidden[:, None, :], (B, S, H))
    cat = jnp.concatenate([h_rep, encoder_outputs], axis=-1)
    energy = jnp.tanh(cat @ params["attn_w"].T + params["attn_b"])
    scores = (energy @ params["v_w"].T)[..., 0]
    attn = jax.nn.softmax(scores, axis=1)
    weighted = jnp.einsum("bs,bse->be", attn, encoder_outputs)
    rnn_in = jnp.concatenate([input_seq, weighted], axis=-1)
    gates = (rnn_in @ params["w_ih"].T + params["b_ih"]
             + hidden @ params["w_hh"].T + params["b_hh"])
    i_g = jax.nn.sigmoid(gates[:, 0 * H:1 * H])
    f_g = jax.nn.sigmoid(gates[:, 1 * H:2 * H])
    g_g = jnp.tanh(gates[:, 2 * H:3 * H])
    o_g = jax.nn.sigmoid(gates[:, 3 * H:4 * H])
    c_new = f_g * cell + i_g * g_g
    h_new = o_g * jnp.tanh(c_new)
    pred = h_new @ params["fc_w"].T + params["fc_b"]
    return pred, attn[:, None, :], h_new, c_new


def make_params(key, vocab_len, input_dim, dec_hid_dim):
    H = dec_hid_dim
    lstm_in = 2 * H + input_dim
    attn_in = 3 * H
    ks = jax.random.split(key, 9)

    def unif(k, shape, fan_in):
        bound = 1.0 / jnp.sqrt(jnp.float32(fan_in))
        return jax.random.uniform(k, shape, jnp.float32, -bound, bound)

    return {
        "attn_w": unif(ks[0], (H, attn_in), attn_in),
        "attn_b": unif(ks[1], (H,), attn_in),
        "v_w":    unif(ks[2], (1, H), H),
        "w_ih":   unif(ks[3], (4 * H, lstm_in), H),
        "w_hh":   unif(ks[4], (4 * H, H), H),
        "b_ih":   unif(ks[5], (4 * H,), H),
        "b_hh":   unif(ks[6], (4 * H,), H),
        "fc_w":   unif(ks[7], (vocab_len, H), H),
        "fc_b":   unif(ks[8], (vocab_len,), H),
    }


if __name__ == "__main__":
    B, input_dim, dec_hid_dim, src_len, vocab_len = 2, 16, 32, 8, 50

    key = jax.random.PRNGKey(0)
    k_in, k_h, k_c, k_enc, k_p = jax.random.split(key, 5)

    input_seq = jax.random.normal(k_in, (B, input_dim), jnp.float32)
    hidden = jax.random.normal(k_h, (B, dec_hid_dim), jnp.float32)
    cell = jax.random.normal(k_c, (B, dec_hid_dim), jnp.float32)
    encoder_outputs = jax.random.normal(
        k_enc, (B, src_len, 2 * dec_hid_dim), jnp.float32)
    params = make_params(k_p, vocab_len, input_dim, dec_hid_dim)

    # One-time weight preparation (outside the decode loop).
    prepped = prepare_params(params, input_dim, weight_dtype=jnp.float32)

    outs = decoder_lstm_forward(input_seq, hidden, cell,
                                encoder_outputs, prepped)
    outs = jax.block_until_ready(outs)

    refs = decoder_lstm_reference(input_seq, hidden, cell,
                                  encoder_outputs, params)
    for o, r in zip(outs, refs):
        assert o.shape == r.shape, (o.shape, r.shape)
        assert jnp.max(jnp.abs(o - r)) < 1e-4, float(jnp.max(jnp.abs(o - r)))

    print("KERNEL_OK")
</pallas_src>

<mosaic_0001>
module attributes {stable_mosaic.version = 11 : i64} {
  func.func @attn_lstm_kernel(%arg0: i32, %arg1: memref<2x16xf32, #tpu.memory_space<vmem>>, %arg2: memref<2x32xf32, #tpu.memory_space<vmem>>, %arg3: memref<2x32xf32, #tpu.memory_space<vmem>>, %arg4: memref<2x8x64xf32, #tpu.memory_space<vmem>>, %arg5: memref<32x32xf32, #tpu.memory_space<vmem>>, %arg6: memref<32x64xf32, #tpu.memory_space<vmem>>, %arg7: memref<1x32xf32, #tpu.memory_space<vmem>>, %arg8: memref<1x32xf32, #tpu.memory_space<vmem>>, %arg9: memref<128x16xf32, #tpu.memory_space<vmem>>, %arg10: memref<128x64xf32, #tpu.memory_space<vmem>>, %arg11: memref<128x32xf32, #tpu.memory_space<vmem>>, %arg12: memref<1x128xf32, #tpu.memory_space<vmem>>, %arg13: memref<2x1x8xf32, #tpu.memory_space<vmem>>, %arg14: memref<2x32xf32, #tpu.memory_space<vmem>>, %arg15: memref<2x32xf32, #tpu.memory_space<vmem>>) attributes {dimension_semantics = [#tpu.dimension_semantics<arbitrary>], iteration_bounds = array<i64: 1>, scalar_prefetch = 0 : i64, scratch_operands = 0 : i64, tpu.core_type = #tpu.core_type<tc>, window_params = [{pipeline_mode = #tpu.pipeline_mode<synchronous>, transform_indices = @transform_0, window_bounds = array<i64: 2, 16>}, {pipeline_mode = #tpu.pipeline_mode<synchronous>, transform_indices = @transform_1, window_bounds = array<i64: 2, 32>}, {pipeline_mode = #tpu.pipeline_mode<synchronous>, transform_indices = @transform_2, window_bounds = array<i64: 2, 32>}, {pipeline_mode = #tpu.pipeline_mode<synchronous>, transform_indices = @transform_3, window_bounds = array<i64: 2, 8, 64>}, {pipeline_mode = #tpu.pipeline_mode<synchronous>, transform_indices = @transform_4, window_bounds = array<i64: 32, 32>}, {pipeline_mode = #tpu.pipeline_mode<synchronous>, transform_indices = @transform_5, window_bounds = array<i64: 32, 64>}, {pipeline_mode = #tpu.pipeline_mode<synchronous>, transform_indices = @transform_6, window_bounds = array<i64: 1, 32>}, {pipeline_mode = #tpu.pipeline_mode<synchronous>, transform_indices = @transform_7, window_bounds = array<i64: 1, 32>}, {pipeline_mode = #tpu.pipeline_mode<synchronous>, transform_indices = @transform_8, window_bounds = array<i64: 128, 16>}, {pipeline_mode = #tpu.pipeline_mode<synchronous>, transform_indices = @transform_9, window_bounds = array<i64: 128, 64>}, {pipeline_mode = #tpu.pipeline_mode<synchronous>, transform_indices = @transform_10, window_bounds = array<i64: 128, 32>}, {pipeline_mode = #tpu.pipeline_mode<synchronous>, transform_indices = @transform_11, window_bounds = array<i64: 1, 128>}, {pipeline_mode = #tpu.pipeline_mode<synchronous>, transform_indices = @transform_12, window_bounds = array<i64: 2, 1, 8>}, {pipeline_mode = #tpu.pipeline_mode<synchronous>, transform_indices = @transform_13, window_bounds = array<i64: 2, 32>}, {pipeline_mode = #tpu.pipeline_mode<synchronous>, transform_indices = @transform_14, window_bounds = array<i64: 2, 32>}]} {
    %c0 = arith.constant 0 : index
    %c0_0 = arith.constant 0 : index
    %0 = vector.load %arg2[%c0, %c0_0] : memref<2x32xf32, #tpu.memory_space<vmem>>, vector<2x32xf32>
    %c0_1 = arith.constant 0 : index
    %c0_2 = arith.constant 0 : index
    %c0_3 = arith.constant 0 : index
    %1 = vector.load %arg4[%c0_1, %c0_2, %c0_3] : memref<2x8x64xf32, #tpu.memory_space<vmem>>, vector<2x8x64xf32>
    %c0_4 = arith.constant 0 : index
    %c0_5 = arith.constant 0 : index
    %2 = vector.load %arg5[%c0_4, %c0_5] : memref<32x32xf32, #tpu.memory_space<vmem>>, vector<32x32xf32>
    %cst = arith.constant dense<0.000000e+00> : vector<2x32xf32>
    %3 = tpu.matmul %0, %2, %cst {dimension_numbers = #tpu.dot_dimension_numbers<[1], [1], [0], [0], [0, 0, 1, 0], [], []>} : vector<2x32xf32>, vector<32x32xf32>, vector<2x32xf32> -> vector<2x32xf32>
    %4 = vector.shape_cast %1 : vector<2x8x64xf32> to vector<16x64xf32>
    %c0_6 = arith.constant 0 : index
    %c0_7 = arith.constant 0 : index
    %5 = vector.load %arg6[%c0_6, %c0_7] : memref<32x64xf32, #tpu.memory_space<vmem>>, vector<32x64xf32>
    %cst_8 = arith.constant dense<0.000000e+00> : vector<16x32xf32>
    %6 = tpu.matmul %4, %5, %cst_8 {dimension_numbers = #tpu.dot_dimension_numbers<[1], [1], [0], [0], [0, 0, 1, 0], [], []>} : vector<16x64xf32>, vector<32x64xf32>, vector<16x32xf32> -> vector<16x32xf32>
    %7 = vector.shape_cast %6 : vector<16x32xf32> to vector<2x8x32xf32>
    %8 = vector.shape_cast %3 : vector<2x32xf32> to vector<2x1x32xf32>
    %9 = vector.broadcast %8 : vector<2x1x32xf32> to vector<2x8x32xf32>
    %10 = arith.addf %7, %9 : vector<2x8x32xf32>
    %c0_9 = arith.constant 0 : index
    %c0_10 = arith.constant 0 : index
    %11 = vector.load %arg7[%c0_9, %c0_10] : memref<1x32xf32, #tpu.memory_space<vmem>>, vector<1x32xf32>
    %12 = vector.shape_cast %11 : vector<1x32xf32> to vector<1x1x32xf32>
    %13 = vector.broadcast %12 : vector<1x1x32xf32> to vector<2x8x32xf32>
    %14 = arith.addf %10, %13 : vector<2x8x32xf32>
    %15 = math.tanh %14 : vector<2x8x32xf32>
    %c0_11 = arith.constant 0 : index
    %c0_12 = arith.constant 0 : index
    %16 = vector.load %arg8[%c0_11, %c0_12] : memref<1x32xf32, #tpu.memory_space<vmem>>, vector<1x32xf32>
    %17 = vector.shape_cast %16 : vector<1x32xf32> to vector<1x1x32xf32>
    %18 = vector.broadcast %17 : vector<1x1x32xf32> to vector<2x8x32xf32>
    %19 = arith.mulf %15, %18 : vector<2x8x32xf32>
    %cst_13 = arith.constant dense<0.000000e+00> : vector<2x8xf32>
    %20 = vector.multi_reduction <add>, %19, %cst_13 [2] : vector<2x8x32xf32> to vector<2x8xf32>
    %cst_14 = arith.constant dense<0xFF800000> : vector<2xf32>
    %21 = vector.multi_reduction <maximumf>, %20, %cst_14 [1] : vector<2x8xf32> to vector<2xf32>
    %22 = vector.shape_cast %21 : vector<2xf32> to vector<2x1xf32>
    %23 = vector.broadcast %22 : vector<2x1xf32> to vector<2x8xf32>
    %24 = arith.subf %20, %23 : vector<2x8xf32>
    %25 = math.exp %24 : vector<2x8xf32>
    %cst_15 = arith.constant dense<0.000000e+00> : vector<2xf32>
    %26 = vector.multi_reduction <add>, %25, %cst_15 [1] : vector<2x8xf32> to vector<2xf32>
    %27 = vector.shape_cast %26 : vector<2xf32> to vector<2x1xf32>
    %28 = vector.broadcast %27 : vector<2x1xf32> to vector<2x8xf32>
    %29 = arith.divf %25, %28 : vector<2x8xf32>
    %30 = vector.shape_cast %29 : vector<2x8xf32> to vector<2x1x8xf32>
    %c0_16 = arith.constant 0 : index
    %c0_17 = arith.constant 0 : index
    %c0_18 = arith.constant 0 : index
    %31 = vector.load %arg13[%c0_16, %c0_17, %c0_18] : memref<2x1x8xf32, #tpu.memory_space<vmem>>, vector<2x1x8xf32>
    tpu.vector_store %arg13[%c0_16, %c0_17, %c0_18], %30 {strides = array<i32>} : memref<2x1x8xf32, #tpu.memory_space<vmem>>, vector<2x1x8xf32>,
    %32 = vector.shape_cast %29 : vector<2x8xf32> to vector<2x8x1xf32>
    %33 = vector.broadcast %32 : vector<2x8x1xf32> to vector<2x8x64xf32>
    %34 = arith.mulf %33, %1 : vector<2x8x64xf32>
    %cst_19 = arith.constant dense<0.000000e+00> : vector<2x64xf32>
    %35 = vector.multi_reduction <add>, %34, %cst_19 [1] : vector<2x8x64xf32> to vector<2x64xf32>
    %c0_20 = arith.constant 0 : index
    %c0_21 = arith.constant 0 : index
    %36 = vector.load %arg1[%c0_20, %c0_21] : memref<2x16xf32, #tpu.memory_space<vmem>>, vector<2x16xf32>
    %c0_22 = arith.constant 0 : index
    %c0_23 = arith.constant 0 : index
    %37 = vector.load %arg9[%c0_22, %c0_23] : memref<128x16xf32, #tpu.memory_space<vmem>>, vector<128x16xf32>
    %cst_24 = arith.constant dense<0.000000e+00> : vector<2x128xf32>
    %38 = tpu.matmul %36, %37, %cst_24 {dimension_numbers = #tpu.dot_dimension_numbers<[1], [1], [0], [0], [0, 0, 1, 0], [], []>} : vector<2x16xf32>, vector<128x16xf32>, vector<2x128xf32> -> vector<2x128xf32>
    %c0_25 = arith.constant 0 : index
    %c0_26 = arith.constant 0 : index
    %39 = vector.load %arg10[%c0_25, %c0_26] : memref<128x64xf32, #tpu.memory_space<vmem>>, vector<128x64xf32>
    %cst_27 = arith.constant dense<0.000000e+00> : vector<2x128xf32>
    %40 = tpu.matmul %35, %39, %cst_27 {dimension_numbers = #tpu.dot_dimension_numbers<[1], [1], [0], [0], [0, 0, 1, 0], [], []>} : vector<2x64xf32>, vector<128x64xf32>, vector<2x128xf32> -> vector<2x128xf32>
    %41 = arith.addf %38, %40 : vector<2x128xf32>
    %c0_28 = arith.constant 0 : index
    %c0_29 = arith.constant 0 : index
    %42 = vector.load %arg11[%c0_28, %c0_29] : memref<128x32xf32, #tpu.memory_space<vmem>>, vector<128x32xf32>
    %cst_30 = arith.constant dense<0.000000e+00> : vector<2x128xf32>
    %43 = tpu.matmul %0, %42, %cst_30 {dimension_numbers = #tpu.dot_dimension_numbers<[1], [1], [0], [0], [0, 0, 1, 0], [], []>} : vector<2x32xf32>, vector<128x32xf32>, vector<2x128xf32> -> vector<2x128xf32>
    %44 = arith.addf %41, %43 : vector<2x128xf32>
    %c0_31 = arith.constant 0 : index
    %c0_32 = arith.constant 0 : index
    %45 = vector.load %arg12[%c0_31, %c0_32] : memref<1x128xf32, #tpu.memory_space<vmem>>, vector<1x128xf32>
    %46 = vector.broadcast %45 : vector<1x128xf32> to vector<2x128xf32>
    %47 = arith.addf %44, %46 : vector<2x128xf32>
    %48 = vector.extract_strided_slice %47 {offsets = [0, 0], sizes = [2, 32], strides = [1, 1]} : vector<2x128xf32> to vector<2x32xf32>
    %49 = arith.negf %48 : vector<2x32xf32>
    %50 = math.exp %49 : vector<2x32xf32>
    %cst_33 = arith.constant 1.000000e+00 : f32
    %51 = vector.broadcast %cst_33 : f32 to vector<2x32xf32>
    %52 = arith.addf %51, %50 : vector<2x32xf32>
    %53 = arith.divf %51, %52 : vector<2x32xf32>
    %54 = vector.extract_strided_slice %47 {offsets = [0, 32], sizes = [2, 32], strides = [1, 1]} : vector<2x128xf32> to vector<2x32xf32>
    %55 = arith.negf %54 : vector<2x32xf32>
    %56 = math.exp %55 : vector<2x32xf32>
    %cst_34 = arith.constant 1.000000e+00 : f32
    %57 = vector.broadcast %cst_34 : f32 to vector<2x32xf32>
    %58 = arith.addf %57, %56 : vector<2x32xf32>
    %59 = arith.divf %57, %58 : vector<2x32xf32>
    %60 = vector.extract_strided_slice %47 {offsets = [0, 64], sizes = [2, 32], strides = [1, 1]} : vector<2x128xf32> to vector<2x32xf32>
    %61 = math.tanh %60 : vector<2x32xf32>
    %62 = vector.extract_strided_slice %47 {offsets = [0, 96], sizes = [2, 32], strides = [1, 1]} : vector<2x128xf32> to vector<2x32xf32>
    %63 = arith.negf %62 : vector<2x32xf32>
    %64 = math.exp %63 : vector<2x32xf32>
    %cst_35 = arith.constant 1.000000e+00 : f32
    %65 = vector.broadcast %cst_35 : f32 to vector<2x32xf32>
    %66 = arith.addf %65, %64 : vector<2x32xf32>
    %67 = arith.divf %65, %66 : vector<2x32xf32>
    %c0_36 = arith.constant 0 : index
    %c0_37 = arith.constant 0 : index
    %68 = vector.load %arg3[%c0_36, %c0_37] : memref<2x32xf32, #tpu.memory_space<vmem>>, vector<2x32xf32>
    %69 = arith.mulf %59, %68 : vector<2x32xf32>
    %70 = arith.mulf %53, %61 : vector<2x32xf32>
    %71 = arith.addf %69, %70 : vector<2x32xf32>
    %72 = math.tanh %71 : vector<2x32xf32>
    %73 = arith.mulf %67, %72 : vector<2x32xf32>
    %c0_38 = arith.constant 0 : index
    %c0_39 = arith.constant 0 : index
    %74 = vector.load %arg14[%c0_38, %c0_39] : memref<2x32xf32, #tpu.memory_space<vmem>>, vector<2x32xf32>
    tpu.vector_store %arg14[%c0_38, %c0_39], %73 {strides = array<i32>} : memref<2x32xf32, #tpu.memory_space<vmem>>, vector<2x32xf32>,
    %c0_40 = arith.constant 0 : index
    %c0_41 = arith.constant 0 : index
    %75 = vector.load %arg15[%c0_40, %c0_41] : memref<2x32xf32, #tpu.memory_space<vmem>>, vector<2x32xf32>
    tpu.vector_store %arg15[%c0_40, %c0_41], %71 {strides = array<i32>} : memref<2x32xf32, #tpu.memory_space<vmem>>, vector<2x32xf32>,
    return
  }
  func.func @transform_0(%arg0: i32) -> (i32, i32) {
    %c0_i32 = arith.constant 0 : i32
    %c0_i32_0 = arith.constant 0 : i32
    %c0_i32_1 = arith.constant 0 : i32
    return %c0_i32, %c0_i32_0 : i32, i32
  }
  func.func @transform_1(%arg0: i32) -> (i32, i32) {
    %c0_i32 = arith.constant 0 : i32
    %c0_i32_0 = arith.constant 0 : i32
    %c0_i32_1 = arith.constant 0 : i32
    return %c0_i32, %c0_i32_0 : i32, i32
  }
  func.func @transform_2(%arg0: i32) -> (i32, i32) {
    %c0_i32 = arith.constant 0 : i32
    %c0_i32_0 = arith.constant 0 : i32
    %c0_i32_1 = arith.constant 0 : i32
    return %c0_i32, %c0_i32_0 : i32, i32
  }
  func.func @transform_3(%arg0: i32) -> (i32, i32, i32) {
    %c0_i32 = arith.constant 0 : i32
    %c0_i32_0 = arith.constant 0 : i32
    %c0_i32_1 = arith.constant 0 : i32
    %c0_i32_2 = arith.constant 0 : i32
    return %c0_i32, %c0_i32_0, %c0_i32_1 : i32, i32, i32
  }
  func.func @transform_4(%arg0: i32) -> (i32, i32) {
    %c0_i32 = arith.constant 0 : i32
    %c0_i32_0 = arith.constant 0 : i32
    %c0_i32_1 = arith.constant 0 : i32
    return %c0_i32, %c0_i32_0 : i32, i32
  }
  func.func @transform_5(%arg0: i32) -> (i32, i32) {
    %c0_i32 = arith.constant 0 : i32
    %c0_i32_0 = arith.constant 0 : i32
    %c0_i32_1 = arith.constant 0 : i32
    return %c0_i32, %c0_i32_0 : i32, i32
  }
  func.func @transform_6(%arg0: i32) -> (i32, i32) {
    %c0_i32 = arith.constant 0 : i32
    %c0_i32_0 = arith.constant 0 : i32
    %c0_i32_1 = arith.constant 0 : i32
    return %c0_i32, %c0_i32_0 : i32, i32
  }
  func.func @transform_7(%arg0: i32) -> (i32, i32) {
    %c0_i32 = arith.constant 0 : i32
    %c0_i32_0 = arith.constant 0 : i32
    %c0_i32_1 = arith.constant 0 : i32
    return %c0_i32, %c0_i32_0 : i32, i32
  }
  func.func @transform_8(%arg0: i32) -> (i32, i32) {
    %c0_i32 = arith.constant 0 : i32
    %c0_i32_0 = arith.constant 0 : i32
    %c0_i32_1 = arith.constant 0 : i32
    return %c0_i32, %c0_i32_0 : i32, i32
  }
  func.func @transform_9(%arg0: i32) -> (i32, i32) {
    %c0_i32 = arith.constant 0 : i32
    %c0_i32_0 = arith.constant 0 : i32
    %c0_i32_1 = arith.constant 0 : i32
    return %c0_i32, %c0_i32_0 : i32, i32
  }
  func.func @transform_10(%arg0: i32) -> (i32, i32) {
    %c0_i32 = arith.constant 0 : i32
    %c0_i32_0 = arith.constant 0 : i32
    %c0_i32_1 = arith.constant 0 : i32
    return %c0_i32, %c0_i32_0 : i32, i32
  }
  func.func @transform_11(%arg0: i32) -> (i32, i32) {
    %c0_i32 = arith.constant 0 : i32
    %c0_i32_0 = arith.constant 0 : i32
    %c0_i32_1 = arith.constant 0 : i32
    return %c0_i32, %c0_i32_0 : i32, i32
  }
  func.func @transform_12(%arg0: i32) -> (i32, i32, i32) {
    %c0_i32 = arith.constant 0 : i32
    %c0_i32_0 = arith.constant 0 : i32
    %c0_i32_1 = arith.constant 0 : i32
    %c0_i32_2 = arith.constant 0 : i32
    return %c0_i32, %c0_i32_0, %c0_i32_1 : i32, i32, i32
  }
  func.func @transform_13(%arg0: i32) -> (i32, i32) {
    %c0_i32 = arith.constant 0 : i32
    %c0_i32_0 = arith.constant 0 : i32
    %c0_i32_1 = arith.constant 0 : i32
    return %c0_i32, %c0_i32_0 : i32, i32
  }
  func.func @transform_14(%arg0: i32) -> (i32, i32) {
    %c0_i32 = arith.constant 0 : i32
    %c0_i32_0 = arith.constant 0 : i32
    %c0_i32_1 = arith.constant 0 : i32
    return %c0_i32, %c0_i32_0 : i32, i32
  }
}

</mosaic_0001>

<llo_original>
// kernel: tpu_custom_call.1
$region0: #{tpu_custom_call.1}
  #allocation0 [shape = 'u32[]', space=smem, size = 0x4, offset = 0x4, fixed_abs, tag = 'smem constant byte address 0x4 - core index']
  #allocation1 [shape = 'u32[72,128]{1,0:T(1,128)}', space=vmem, size = 0x9000, scoped, tag = 'internal scratch']
  %s0 = inlined_call_operand.vmem [shape: f32[2,16], index: 0, kind: input, shape index: {}]
  %s1 = inlined_call_operand.vmem [shape: f32[2,32], index: 1, kind: input, shape index: {}]
  %s2 = inlined_call_operand.vmem [shape: f32[2,32], index: 2, kind: input, shape index: {}]
  %s3 = inlined_call_operand.vmem [shape: f32[2,8,64], index: 3, kind: input, shape index: {}]
  %s4 = inlined_call_operand.vmem [shape: f32[32,32], index: 4, kind: input, shape index: {}]
  %s5 = inlined_call_operand.vmem [shape: f32[32,64], index: 5, kind: input, shape index: {}]
  %s6 = inlined_call_operand.vmem [shape: f32[1,32], index: 6, kind: input, shape index: {}]
  %s7 = inlined_call_operand.vmem [shape: f32[1,32], index: 7, kind: input, shape index: {}]
  %s8 = inlined_call_operand.vmem [shape: f32[128,16], index: 8, kind: input, shape index: {}]
  %s9 = inlined_call_operand.vmem [shape: f32[128,64], index: 9, kind: input, shape index: {}]
  %s10 = inlined_call_operand.vmem [shape: f32[128,32], index: 10, kind: input, shape index: {}]
  %s11 = inlined_call_operand.vmem [shape: f32[1,128], index: 11, kind: input, shape index: {}]
  %s12 = inlined_call_operand.hbm [shape: f32[2,1,8], index: 12, kind: output, shape index: {0}]
  %s13 = inlined_call_operand.hbm [shape: f32[2,32], index: 13, kind: output, shape index: {1}]
  %s14 = inlined_call_operand.hbm [shape: f32[2,32], index: 14, kind: output, shape index: {2}]
  %15 = xla_tuple %s12, %s13, %s14
  %s16 = sld [smem:[#allocation0]]
  $region74: #{tpu_custom_call.1} parent=0
    _
  %s18 = ssub.s32 1, %s16
  %s19 = scalar_select 0, %s18, %s16
  $region1: #{tpu_custom_call.1} parent=0
    #allocation2 [shape = 'u8[1024]{0}', space=vmem, size = 0x400, scoped, tag = 'output window, operand 0, single buffered']
    #allocation3 [shape = 's32[1]{0}', space=sflag, size = 0x4, scoped, tag = 'scoped memory for tpu_custom_call.1']
    #allocation4 [shape = 'u8[1024]{0}', space=vmem, size = 0x400, scoped, tag = 'output window, operand 1, single buffered']
    #allocation5 [shape = 's32[1]{0}', space=sflag, size = 0x4, scoped, tag = 'scoped memory for tpu_custom_call.1']
    #allocation6 [shape = 'u8[1024]{0}', space=vmem, size = 0x400, scoped, tag = 'output window, operand 2, single buffered']
    %20 = vsyncpa [#allocation3], 0
    %21 = vsyncpa [#allocation5], 0
    // Predicated region
    $region2: #{tpu_custom_call.1} parent=1 // pred_check
      _
    $region3: #{tpu_custom_call.1} parent=1 // pred_check_branch
      %23 = sbr.rel (0) target = $region5
    $region4: #{tpu_custom_call.1} parent=1 // pred_region
      _
    $region5: #{tpu_custom_call.1} parent=1 // pred_fallthru
      _
    // Predicated region
    $region6: #{tpu_custom_call.1} parent=1 // pred_check
      _
    $region7: #{tpu_custom_call.1} parent=1 // pred_check_branch
      %25 = sbr.rel (0) target = $region9
    $region8: #{tpu_custom_call.1} parent=1 // pred_region
      _
    $region9: #{tpu_custom_call.1} parent=1 // pred_fallthru
      _
    // Predicated region
    $region10: #{tpu_custom_call.1} parent=1 // pred_check
      _
    $region11: #{tpu_custom_call.1} parent=1 // pred_check_branch
      %27 = sbr.rel (0) target = $region13
    $region12: #{tpu_custom_call.1} parent=1 // pred_region
      _
    $region13: #{tpu_custom_call.1} parent=1 // pred_fallthru
      _
    // Predicated region
    $region14: #{tpu_custom_call.1} parent=1 // pred_check
      _
    $region15: #{tpu_custom_call.1} parent=1 // pred_check_branch
      %29 = sbr.rel (0) target = $region17
    $region16: #{tpu_custom_call.1} parent=1 // pred_region
      _
    $region17: #{tpu_custom_call.1} parent=1 // pred_fallthru
      _
    // Predicated region
    $region18: #{tpu_custom_call.1} parent=1 // pred_check
      _
    $region19: #{tpu_custom_call.1} parent=1 // pred_check_branch
      %31 = sbr.rel (0) target = $region21
    $region20: #{tpu_custom_call.1} parent=1 // pred_region
      _
    $region21: #{tpu_custom_call.1} parent=1 // pred_fallthru
      _
    // Predicated region
    $region22: #{tpu_custom_call.1} parent=1 // pred_check
      _
    $region23: #{tpu_custom_call.1} parent=1 // pred_check_branch
      %33 = sbr.rel (0) target = $region25
    $region24: #{tpu_custom_call.1} parent=1 // pred_region
      _
    $region25: #{tpu_custom_call.1} parent=1 // pred_fallthru
      _
    // Predicated region
    $region26: #{tpu_custom_call.1} parent=1 // pred_check
      _
    $region27: #{tpu_custom_call.1} parent=1 // pred_check_branch
      %35 = sbr.rel (0) target = $region29
    $region28: #{tpu_custom_call.1} parent=1 // pred_region
      _
    $region29: #{tpu_custom_call.1} parent=1 // pred_fallthru
      _
    // Predicated region
    $region30: #{tpu_custom_call.1} parent=1 // pred_check
      _
    $region31: #{tpu_custom_call.1} parent=1 // pred_check_branch
      %37 = sbr.rel (0) target = $region33
    $region32: #{tpu_custom_call.1} parent=1 // pred_region
      _
    $region33: #{tpu_custom_call.1} parent=1 // pred_fallthru
      _
    // Predicated region
    $region34: #{tpu_custom_call.1} parent=1 // pred_check
      _
    $region35: #{tpu_custom_call.1} parent=1 // pred_check_branch
      %39 = sbr.rel (0) target = $region37
    $region36: #{tpu_custom_call.1} parent=1 // pred_region
      _
    $region37: #{tpu_custom_call.1} parent=1 // pred_fallthru
      _
    // Predicated region
    $region38: #{tpu_custom_call.1} parent=1 // pred_check
      _
    $region39: #{tpu_custom_call.1} parent=1 // pred_check_branch
      %41 = sbr.rel (0) target = $region41
    $region40: #{tpu_custom_call.1} parent=1 // pred_region
      _
    $region41: #{tpu_custom_call.1} parent=1 // pred_fallthru
      _
    // Predicated region
    $region42: #{tpu_custom_call.1} parent=1 // pred_check
      _
    $region43: #{tpu_custom_call.1} parent=1 // pred_check_branch
      %43 = sbr.rel (0) target = $region45
    $region44: #{tpu_custom_call.1} parent=1 // pred_region
      _
    $region45: #{tpu_custom_call.1} parent=1 // pred_fallthru
      _
    // Predicated region
    $region46: #{tpu_custom_call.1} parent=1 // pred_check
      _
    $region47: #{tpu_custom_call.1} parent=1 // pred_check_branch
      %45 = sbr.rel (0) target = $region49
    $region48: #{tpu_custom_call.1} parent=1 // pred_region
      _
    $region49: #{tpu_custom_call.1} parent=1 // pred_fallthru
      _
    %v46 = vld [vmem:[%s1] sm:$0x3]
    %v47 = vld [vmem:[%s3] sm:$0xff]
    %v48 = vld [vmem:[%s3 + $0x8] sm:$0xff]
    %v49 = vld [vmem:[%s4] sm:$0xff]
    %v50 = vld [vmem:[%s4 + $0x8] sm:$0xff]
    %v51 = vld [vmem:[%s4 + $0x10] sm:$0xff]
    %v52 = vld [vmem:[%s4 + $0x18] sm:$0xff]
    %vm53 = vcmask 261120
    %v55 = vsel %vm53, %v46, 0
    %v58 = vsel %vm53, %v49, 0
    %v61 = vsel %vm53, %v50, 0
    %v64 = vsel %vm53, %v51, 0
    %v67 = vsel %vm53, %v52, 0
    %69 = vmatpush.xpose.msra.mxu0 0.0
    %70 = vmatpush.xpose.msra.mxu0 0.0
    %71 = vmatpush.xpose.msra.mxu0 0.0
    %72 = vmatpush.xpose.msra.mxu0 0.0
    %73 = vmatpush.xpose.msra.mxu0 0.0
    %74 = vmatpush.xpose.msra.mxu0 0.0
    %75 = vmatpush.xpose.msra.mxu0 0.0
    %76 = vmatpush.xpose.msra.mxu0 0.0
    %77 = vmatpush.xpose.msra.mxu0 0.0
    %78 = vmatpush.xpose.msra.mxu0 0.0
    %79 = vmatpush.xpose.msra.mxu0 0.0
    %80 = vmatpush.xpose.msra.mxu0 0.0
    %81 = vmatpush.xpose.msra.mxu0 %v67
    %82 = vmatpush.xpose.msra.mxu0 %v64
    %83 = vmatpush.xpose.msra.mxu0 %v61
    %84 = vmatpush.xpose.msra.mxu0 %v58
    %85 = vmatmul.f32.gmra.mxu0 %v55
    %v86 = vpop.f32.mrf.mxu0
    %v87 = vadd.f32 0.0, %v86
    %88 = vdwg.mxu0
    %v89 = vld [vmem:[%s5] sm:$0xff]
    %v90 = vld [vmem:[%s5 + $0x8] sm:$0xff]
    %v91 = vld [vmem:[%s5 + $0x10] sm:$0xff]
    %v92 = vld [vmem:[%s5 + $0x18] sm:$0xff]
    %vm93 = vcmask 523264
    %v95 = vsel %vm93, %v47, 0
    %v98 = vsel %vm93, %v48, 0
    %v101 = vsel %vm93, %v89, 0
    %v104 = vsel %vm93, %v90, 0
    %v107 = vsel %vm93, %v91, 0
    %v110 = vsel %vm93, %v92, 0
    %112 = vmatpush.xpose.msra.mxu0 0.0
    %113 = vmatpush.xpose.msra.mxu0 0.0
    %114 = vmatpush.xpose.msra.mxu0 0.0
    %115 = vmatpush.xpose.msra.mxu0 0.0
    %116 = vmatpush.xpose.msra.mxu0 0.0
    %117 = vmatpush.xpose.msra.mxu0 0.0
    %118 = vmatpush.xpose.msra.mxu0 0.0
    %119 = vmatpush.xpose.msra.mxu0 0.0
    %120 = vmatpush.xpose.msra.mxu0 0.0
    %121 = vmatpush.xpose.msra.mxu0 0.0
    %122 = vmatpush.xpose.msra.mxu0 0.0
    %123 = vmatpush.xpose.msra.mxu0 0.0
    %124 = vmatpush.xpose.msra.mxu0 %v110
    %125 = vmatpush.xpose.msra.mxu0 %v107
    %126 = vmatpush.xpose.msra.mxu0 %v104
    %127 = vmatpush.xpose.msra.mxu0 %v101
    %128 = vmatmul.f32.gmra.mxu0 %v95
    %v129 = vpop.f32.mrf.mxu0
    %v130 = vadd.f32 0.0, %v129
    %131 = vmatmul.f32.gmra.mxu0 %v98
    %v132 = vpop.f32.mrf.mxu0
    %v133 = vadd.f32 0.0, %v132
    %134 = vdwg.mxu0
    %v136 = vrot.slane %v87, 1
    %v137 = vperm.slane %v87, 0
    %v138 = vperm.slane %v136, 0
    %v141 = vadd.f32 %v130, %v137
    %v142 = vadd.f32 %v133, %v138
    %v143 = vld [vmem:[%s6] sm:$0x1]
    %v145 = vperm.slane %v143, 0
    %v147 = vadd.f32 %v141, %v145
    %v148 = vadd.f32 %v142, %v145
    %v149 = vtanh.pop %v147
    %v150 = vtanh.pop %v148
    %v151 = vld [vmem:[%s7] sm:$0x1]
    %v153 = vperm.slane %v151, 0
    %v155 = vmul.f32 %v149, %v153
    %v156 = vmul.f32 %v150, %v153
    %v157 = vsel %vm53, %v155, 0.0
    %158 = vadd.xlane.f32.xlu0 %v157
    %v159 = vpop.xlane.xlu0 %158
    %v160 = vsel %vm53, %v156, 0.0
    %161 = vadd.xlane.f32.xlu0 %v160
    %v162 = vpop.xlane.xlu0 %161
    %v165 = vlaneseq
    %v166 = vand.u32 %v165, 127
    %v167 = vperm.slane %v159, %v166
    %v168 = vperm.slane %v162, %v166
    %vm169 = vcmask 1041409
    %v170 = vsel %vm169, %v168, %v167
    %vm172 = vcmask 58368
    %v173 = vsel %vm172, %v170, -inf
    %174 = vmax.xlane.f32.xlu0 %v173
    %v175 = vpop.xlane.xlu0 %174
    %v177 = vperm.slane %v175, 0
    %v178 = vperm.slane %v175, 1
    %v181 = vsub.f32 %v159, %v177
    %v182 = vsub.f32 %v162, %v178
    %v183 = vmul.f32 %v181, 1.442695
    %v184 = vpow.pop %v183
    %v185 = vmul.f32 %v182, 1.442695
    %v186 = vpow.pop %v185
    %189 = vset.pattern.permute.xlu0 0
    %190 = vperm.xlu0 %189, %v184
    %v191 = vpop.permute.xlu0 %190
    %192 = vset.pattern.permute.xlu0 0
    %193 = vperm.xlu0 %192, %v186
    %v194 = vpop.permute.xlu0 %193
    %v195 = vperm.slane %v191, %v166
    %v196 = vperm.slane %v194, %v166
    %v197 = vsel %vm169, %v196, %v195
    %v199 = vsel %vm172, %v197, 0.0
    %200 = vadd.xlane.f32.xlu0 %v199
    %v201 = vpop.xlane.xlu0 %200
    %v203 = vperm.slane %v201, 0
    %v204 = vperm.slane %v201, 1
    %v207 = vrcp.pop %v203
    %v208 = vmul.f32 %v203, %v207
    %v209 = vsub.f32 1.0, %v208
    %v210 = vmul.f32 %v207, %v209
    %v211 = vadd.f32 %v207, %v210
    %vm212 = vweird.f32 %v203
    %vm213 = vweird.f32 %v207
    %vm214 = vmor %vm212, %vm213
    %v215 = vsel %vm214, %v207, %v211
    %v216 = vand.u32 2147483647, %v203
    %vm217 = vcmp.eq.f32.partialorder %v216, 8.507059e+37
    %v218 = vand.u32 %v203, 2147483648
    %v219 = vor.u32 1.1754944e-38, %v218
    %v220 = vsel %vm217, %v219, %v215
    %v221 = vmul.f32 %v184, %v220
    %v222 = vrcp.pop %v204
    %v223 = vmul.f32 %v204, %v222
    %v224 = vsub.f32 1.0, %v223
    %v225 = vmul.f32 %v222, %v224
    %v226 = vadd.f32 %v222, %v225
    %vm227 = vweird.f32 %v204
    %vm228 = vweird.f32 %v222
    %vm229 = vmor %vm227, %vm228
    %v230 = vsel %vm229, %v222, %v226
    %v231 = vand.u32 2147483647, %v204
    %vm232 = vcmp.eq.f32.partialorder %v231, 8.507059e+37
    %v233 = vand.u32 %v204, 2147483648
    %v234 = vor.u32 1.1754944e-38, %v233
    %v235 = vsel %vm232, %v234, %v230
    %v236 = vmul.f32 %v186, %v235
    %239 = vset.pattern.permute.xlu0 0
    %240 = vperm.xlu0 %239, %v221
    %v241 = vpop.permute.xlu0 %240
    %242 = vset.pattern.permute.xlu0 0
    %243 = vperm.xlu0 %242, %v236
    %v244 = vpop.permute.xlu0 %243
    %v245 = vperm.slane %v241, %v166
    %v246 = vperm.slane %v244, %v166
    %vm249 = vcmask 57344
    %250 = vst.msk [vmem:[#allocation2] sm:$0x1] %vm249, %v245
    %251 = vst.msk [vmem:[#allocation2 + $0x1] sm:$0x1] %vm249, %v246
    %v254 = vmul.f32 %v241, %v47
    %v255 = vmul.f32 %v244, %v48
    %v256 = vsel %vm93, %v254, 0.0
    %v257 = vrot.slane %v256, 4
    %v258 = vadd.f32 %v256, %v257
    %v259 = vrot.slane %v258, 2
    %v260 = vadd.f32 %v258, %v259
    %v261 = vrot.slane %v260, 1
    %v262 = vadd.f32 %v260, %v261
    %v263 = vsel %vm93, %v255, 0.0
    %v264 = vrot.slane %v263, 4
    %v265 = vadd.f32 %v263, %v264
    %v266 = vrot.slane %v265, 2
    %v267 = vadd.f32 %v265, %v266
    %v268 = vrot.slane %v267, 1
    %v269 = vadd.f32 %v267, %v268
    %v270 = vld [vmem:[%s0] sm:$0x3]
    %v271 = vld [vmem:[%s8] sm:$0xff]
    %v272 = vld [vmem:[%s8 + $0x8] sm:$0xff]
    %v273 = vld [vmem:[%s8 + $0x10] sm:$0xff]
    %v274 = vld [vmem:[%s8 + $0x18] sm:$0xff]
    %v275 = vld [vmem:[%s8 + $0x20] sm:$0xff]
    %v276 = vld [vmem:[%s8 + $0x28] sm:$0xff]
    %v277 = vld [vmem:[%s8 + $0x30] sm:$0xff]
    %v278 = vld [vmem:[%s8 + $0x38] sm:$0xff]
    %v279 = vld [vmem:[%s8 + $0x40] sm:$0xff]
    %v280 = vld [vmem:[%s8 + $0x48] sm:$0xff]
    %v281 = vld [vmem:[%s8 + $0x50] sm:$0xff]
    %v282 = vld [vmem:[%s8 + $0x58] sm:$0xff]
    %v283 = vld [vmem:[%s8 + $0x60] sm:$0xff]
    %v284 = vld [vmem:[%s8 + $0x68] sm:$0xff]
    %v285 = vld [vmem:[%s8 + $0x70] sm:$0xff]
    %v286 = vld [vmem:[%s8 + $0x78] sm:$0xff]
    %v287 = vld [vmem:[%s9] sm:$0xff]
    %v288 = vld [vmem:[%s9 + $0x8] sm:$0xff]
    %v289 = vld [vmem:[%s9 + $0x10] sm:$0xff]
    %v290 = vld [vmem:[%s9 + $0x18] sm:$0xff]
    %v291 = vld [vmem:[%s9 + $0x20] sm:$0xff]
    %v292 = vld [vmem:[%s9 + $0x28] sm:$0xff]
    %v293 = vld [vmem:[%s9 + $0x30] sm:$0xff]
    %v294 = vld [vmem:[%s9 + $0x38] sm:$0xff]
    %v295 = vld [vmem:[%s9 + $0x40] sm:$0xff]
    %v296 = vld [vmem:[%s9 + $0x48] sm:$0xff]
    %v297 = vld [vmem:[%s9 + $0x50] sm:$0xff]
    %v298 = vld [vmem:[%s9 + $0x58] sm:$0xff]
    %v299 = vld [vmem:[%s9 + $0x60] sm:$0xff]
    %v300 = vld [vmem:[%s9 + $0x68] sm:$0xff]
    %v301 = vld [vmem:[%s9 + $0x70] sm:$0xff]
    %v302 = vld [vmem:[%s9 + $0x78] sm:$0xff]
    %v305 = vsel %vm169, %v269, %v262
    %v306 = vsel %vm93, %v305, 0
    %v309 = vsel %vm93, %v287, 0
    %v312 = vsel %vm93, %v288, 0
    %v315 = vsel %vm93, %v289, 0
    %v318 = vsel %vm93, %v290, 0
    %v321 = vsel %vm93, %v291, 0
    %v324 = vsel %vm93, %v292, 0
    %v327 = vsel %vm93, %v293, 0
    %v330 = vsel %vm93, %v294, 0
    %v333 = vsel %vm93, %v295, 0
    %v336 = vsel %vm93, %v296, 0
    %v339 = vsel %vm93, %v297, 0
    %v342 = vsel %vm93, %v298, 0
    %v345 = vsel %vm93, %v299, 0
    %v348 = vsel %vm93, %v300, 0
    %v351 = vsel %vm93, %v301, 0
    %v354 = vsel %vm93, %v302, 0
    %356 = vmatpush.xpose.msra.mxu0 %v354
    %357 = vmatpush.xpose.msra.mxu0 %v351
    %358 = vmatpush.xpose.msra.mxu0 %v348
    %359 = vmatpush.xpose.msra.mxu0 %v345
    %360 = vmatpush.xpose.msra.mxu0 %v342
    %361 = vmatpush.xpose.msra.mxu0 %v339
    %362 = vmatpush.xpose.msra.mxu0 %v336
    %363 = vmatpush.xpose.msra.mxu0 %v333
    %364 = vmatpush.xpose.msra.mxu0 %v330
    %365 = vmatpush.xpose.msra.mxu0 %v327
    %366 = vmatpush.xpose.msra.mxu0 %v324
    %367 = vmatpush.xpose.msra.mxu0 %v321
    %368 = vmatpush.xpose.msra.mxu0 %v318
    %369 = vmatpush.xpose.msra.mxu0 %v315
    %370 = vmatpush.xpose.msra.mxu0 %v312
    %371 = vmatpush.xpose.msra.mxu0 %v309
    %372 = vmatmul.f32.gmra.mxu0 %v306
    %v373 = vpop.f32.mrf.mxu0
    %v374 = vadd.f32 0.0, %v373
    %375 = vdwg.mxu0
    %vm376 = vcmask 130048
    %v378 = vsel %vm376, %v270, 0
    %v381 = vsel %vm376, %v271, 0
    %v384 = vsel %vm376, %v272, 0
    %v387 = vsel %vm376, %v273, 0
    %v390 = vsel %vm376, %v274, 0
    %v393 = vsel %vm376, %v275, 0
    %v396 = vsel %vm376, %v276, 0
    %v399 = vsel %vm376, %v277, 0
    %v402 = vsel %vm376, %v278, 0
    %v405 = vsel %vm376, %v279, 0
    %v408 = vsel %vm376, %v280, 0
    %v411 = vsel %vm376, %v281, 0
    %v414 = vsel %vm376, %v282, 0
    %v417 = vsel %vm376, %v283, 0
    %v420 = vsel %vm376, %v284, 0
    %v423 = vsel %vm376, %v285, 0
    %v426 = vsel %vm376, %v286, 0
    %428 = vmatpush.xpose.msra.mxu0 %v426
    %429 = vmatpush.xpose.msra.mxu0 %v423
    %430 = vmatpush.xpose.msra.mxu0 %v420
    %431 = vmatpush.xpose.msra.mxu0 %v417
    %432 = vmatpush.xpose.msra.mxu0 %v414
    %433 = vmatpush.xpose.msra.mxu0 %v411
    %434 = vmatpush.xpose.msra.mxu0 %v408
    %435 = vmatpush.xpose.msra.mxu0 %v405
    %436 = vmatpush.xpose.msra.mxu0 %v402
    %437 = vmatpush.xpose.msra.mxu0 %v399
    %438 = vmatpush.xpose.msra.mxu0 %v396
    %439 = vmatpush.xpose.msra.mxu0 %v393
    %440 = vmatpush.xpose.msra.mxu0 %v390
    %441 = vmatpush.xpose.msra.mxu0 %v387
    %442 = vmatpush.xpose.msra.mxu0 %v384
    %443 = vmatpush.xpose.msra.mxu0 %v381
    %444 = vmatmul.f32.gmra.mxu0 %v378
    %v445 = vpop.f32.mrf.mxu0
    %v446 = vadd.f32 %v374, %v445
    %447 = vdwg.mxu0
    %v448 = vld [vmem:[%s10] sm:$0xff]
    %v449 = vld [vmem:[%s10 + $0x8] sm:$0xff]
    %v450 = vld [vmem:[%s10 + $0x10] sm:$0xff]
    %v451 = vld [vmem:[%s10 + $0x18] sm:$0xff]
    %v452 = vld [vmem:[%s10 + $0x20] sm:$0xff]
    %v453 = vld [vmem:[%s10 + $0x28] sm:$0xff]
    %v454 = vld [vmem:[%s10 + $0x30] sm:$0xff]
    %v455 = vld [vmem:[%s10 + $0x38] sm:$0xff]
    %v456 = vld [vmem:[%s10 + $0x40] sm:$0xff]
    %v457 = vld [vmem:[%s10 + $0x48] sm:$0xff]
    %v458 = vld [vmem:[%s10 + $0x50] sm:$0xff]
    %v459 = vld [vmem:[%s10 + $0x58] sm:$0xff]
    %v460 = vld [vmem:[%s10 + $0x60] sm:$0xff]
    %v461 = vld [vmem:[%s10 + $0x68] sm:$0xff]
    %v462 = vld [vmem:[%s10 + $0x70] sm:$0xff]
    %v463 = vld [vmem:[%s10 + $0x78] sm:$0xff]
    %v465 = vsel %vm53, %v448, 0
    %v468 = vsel %vm53, %v449, 0
    %v471 = vsel %vm53, %v450, 0
    %v474 = vsel %vm53, %v451, 0
    %v477 = vsel %vm53, %v452, 0
    %v480 = vsel %vm53, %v453, 0
    %v483 = vsel %vm53, %v454, 0
    %v486 = vsel %vm53, %v455, 0
    %v489 = vsel %vm53, %v456, 0
    %v492 = vsel %vm53, %v457, 0
    %v495 = vsel %vm53, %v458, 0
    %v498 = vsel %vm53, %v459, 0
    %v501 = vsel %vm53, %v460, 0
    %v504 = vsel %vm53, %v461, 0
    %v507 = vsel %vm53, %v462, 0
    %v510 = vsel %vm53, %v463, 0
    %512 = vmatpush.xpose.msra.mxu0 %v510
    %513 = vmatpush.xpose.msra.mxu0 %v507
    %514 = vmatpush.xpose.msra.mxu0 %v504
    %515 = vmatpush.xpose.msra.mxu0 %v501
    %516 = vmatpush.xpose.msra.mxu0 %v498
    %517 = vmatpush.xpose.msra.mxu0 %v495
    %518 = vmatpush.xpose.msra.mxu0 %v492
    %519 = vmatpush.xpose.msra.mxu0 %v489
    %520 = vmatpush.xpose.msra.mxu0 %v486
    %521 = vmatpush.xpose.msra.mxu0 %v483
    %522 = vmatpush.xpose.msra.mxu0 %v480
    %523 = vmatpush.xpose.msra.mxu0 %v477
    %524 = vmatpush.xpose.msra.mxu0 %v474
    %525 = vmatpush.xpose.msra.mxu0 %v471
    %526 = vmatpush.xpose.msra.mxu0 %v468
    %527 = vmatpush.xpose.msra.mxu0 %v465
    %528 = vmatmul.f32.gmra.mxu0 %v55
    %v529 = vpop.f32.mrf.mxu0
    %v530 = vadd.f32 0.0, %v529
    %531 = vdwg.mxu0
    %v532 = vadd.f32 %v446, %v530
    %v533 = vld [vmem:[%s11] sm:$0x1]
    %v535 = vperm.slane %v533, 0
    %v537 = vadd.f32 %v532, %v535
    %v538 = vxor.u32 %v537, 2147483648
    %v539 = vmul.f32 %v538, 1.442695
    %v540 = vpow.pop %v539
    %v541 = vadd.f32 %v540, 1.0
    %v542 = vrcp.pop %v541
    %v543 = vmul.f32 %v541, %v542
    %v544 = vsub.f32 1.0, %v543
    %v545 = vmul.f32 %v542, %v544
    %v546 = vadd.f32 %v542, %v545
    %vm547 = vweird.f32 %v541
    %vm548 = vweird.f32 %v542
    %vm549 = vmor %vm547, %vm548
    %v550 = vsel %vm549, %v542, %v546
    %v551 = vand.u32 2147483647, %v541
    %vm552 = vcmp.eq.f32.partialorder %v551, 8.507059e+37
    %v553 = vand.u32 %v541, 2147483648
    %v554 = vor.u32 1.1754944e-38, %v553
    %v555 = vsel %vm552, %v554, %v550
    %v556 = vmul.f32 1.0, %v555
    %v557 = vtanh.pop %v537
    %v558 = vld [vmem:[%s2] sm:$0x3]
    %560 = vrot.lane.b32.xlu0 %v558, 32
    %v561 = vpop.permute.xlu0 %560
    %v563 = vmul.f32 %v556, %v561
    %565 = vrot.lane.b32.xlu0 %v557, 64
    %v566 = vpop.permute.xlu0 %565
    %v568 = vmul.f32 %v556, %v566
    %570 = vrot.lane.b32.xlu0 %v568, 32
    %v571 = vpop.permute.xlu0 %570
    %v573 = vadd.f32 %v563, %v571
    %v574 = vtanh.pop %v573
    %576 = vrot.lane.b32.xlu0 %v574, 64
    %v577 = vpop.permute.xlu0 %576
    %v579 = vmul.f32 %v556, %v577
    %581 = vrot.lane.b32.xlu0 %v579, 32
    %v582 = vpop.permute.xlu0 %581
    %vm584 = vcmask 254976
    %585 = vst.msk [vmem:[#allocation4] sm:$0x3] %vm584, %v582
    %587 = vrot.lane.b32.xlu0 %v573, 96
    %v588 = vpop.permute.xlu0 %587
    %590 = vst.msk [vmem:[#allocation6] sm:$0x3] %vm584, %v588
    // Predicated region
    $region50: #{tpu_custom_call.1} parent=1 // pred_check
      _
    $region51: #{tpu_custom_call.1} parent=1 // pred_check_branch
      %592 = sbr.rel (0) target = $region53
    $region52: #{tpu_custom_call.1} parent=1 // pred_region
      %594 = vsyncadd [#allocation3], 0
      %s595 = sshll.u32 [#allocation2], 4
      %s596 = int_to_ptr.vmem [resolvable:$true] %s595
      %s597 = sshll.u32 %s12, 4
      %s598 = int_to_ptr.hbm [resolvable:$true] %s597
      %603 = dma.vmem_to_hbm [thread:$0]  %s596, 32, %s598, [#allocation3], 16, 16, 1
    $region53: #{tpu_custom_call.1} parent=1 // pred_fallthru
      _
    // Predicated region
    $region54: #{tpu_custom_call.1} parent=1 // pred_check
      _
    $region55: #{tpu_custom_call.1} parent=1 // pred_check_branch
      %605 = sbr.rel (0) target = $region57
    $region56: #{tpu_custom_call.1} parent=1 // pred_region
      %607 = vsyncadd [#allocation5], 0
      %s609 = sshll.u32 [#allocation4], 4
      %s610 = int_to_ptr.vmem [resolvable:$true] %s609
      %s611 = sshll.u32 %s13, 4
      %s612 = int_to_ptr.hbm [resolvable:$true] %s611
      %614 = dma.vmem_to_hbm [thread:$0]  %s610, 32, %s612, [#allocation5]
    $region57: #{tpu_custom_call.1} parent=1 // pred_fallthru
      _
    // Predicated region
    $region58: #{tpu_custom_call.1} parent=1 // pred_check
      _
    $region59: #{tpu_custom_call.1} parent=1 // pred_check_branch
      %616 = sbr.rel (0) target = $region61
    $region60: #{tpu_custom_call.1} parent=1 // pred_region
      %618 = vsyncadd [#allocation5], 0
      %s620 = sshll.u32 [#allocation6], 4
      %s621 = int_to_ptr.vmem [resolvable:$true] %s620
      %s622 = sshll.u32 %s14, 4
      %s623 = int_to_ptr.hbm [resolvable:$true] %s622
      %625 = dma.vmem_to_hbm [thread:$0]  %s621, 32, %s623, [#allocation5]
    $region61: #{tpu_custom_call.1} parent=1 // pred_fallthru
      _
    // Predicated region
    $region62: #{tpu_custom_call.1} parent=1 // pred_check
      _
    $region63: #{tpu_custom_call.1} parent=1 // pred_check_branch
      %627 = sbr.rel (0) target = $region65
    $region64: #{tpu_custom_call.1} parent=1 // pred_region
      %629 = dma.done [#allocation3], 32
    $region65: #{tpu_custom_call.1} parent=1 // pred_fallthru
      _
    // Predicated region
    $region66: #{tpu_custom_call.1} parent=1 // pred_check
      _
    $region67: #{tpu_custom_call.1} parent=1 // pred_check_branch
      %631 = sbr.rel (0) target = $region69
    $region68: #{tpu_custom_call.1} parent=1 // pred_region
      %633 = dma.done [#allocation5], 32
    $region69: #{tpu_custom_call.1} parent=1 // pred_fallthru
      _
    // Predicated region
    $region70: #{tpu_custom_call.1} parent=1 // pred_check
      _
    $region71: #{tpu_custom_call.1} parent=1 // pred_check_branch
      %635 = sbr.rel (0) target = $region73
    $region72: #{tpu_custom_call.1} parent=1 // pred_region
      %637 = dma.done [#allocation5], 32
    $region73: #{tpu_custom_call.1} parent=1 // pred_fallthru
      _
    %638 = vsyncpa [#allocation3], 1
    %639 = vsyncpa [#allocation5], 1

</llo_original>
